<compile_context>
chip_gen: v7x
topology: tpu7x:2x2x1
jax: 0.10.0
libtpu: 0.0.40
codegen_flags: <defaults>
</compile_context>

<pallas_src>
import functools

import jax
import jax.numpy as jnp
from jax.experimental import pallas as pl
from jax.experimental.pallas import tpu as pltpu


def fm3d_kernel(x_ref, smat_ref, w_ref, gamma_ref, beta_ref, o_ref, *, inv_d, eps):
    # x_ref:     (TB, F*E)     input dtype (f32 or bf16), lane-dense
    # smat_ref:  (F*E, E_pad)  f32 0/1 segment-sum matrix (zero-padded cols)
    # w_ref:     (E_pad, D_pad) f32, mean-centered over real D, zero-padded
    # gamma_ref: (1, D_pad)    f32 (gamma*mask, zero-padded)
    # beta_ref:  (1, D_pad)    f32 (beta*mask, zero-padded)
    # o_ref:     (TB, D_pad)   f32
    x = x_ref[...].astype(jnp.float32)                     # (TB, FE)

    # FM interaction term; field-axis reduction done on the MXU so the
    # input stream stays lane-dense.
    s = jnp.dot(x, smat_ref[...], preferred_element_type=jnp.float32)      # (TB, E_pad)
    sq = jnp.dot(x * x, smat_ref[...], preferred_element_type=jnp.float32)  # (TB, E_pad)
    ix = s * s - sq                                        # (TB, E_pad), pad cols = 0

    # Linear projection E -> D_pad with the LayerNorm mean folded into W:
    # y is already mean-centered over the real D columns; padded cols are 0.
    y = jnp.dot(ix, w_ref[...], preferred_element_type=jnp.float32)        # (TB, D_pad)

    var = jnp.sum(y * y, axis=-1, keepdims=True) * inv_d
    yn = y * jax.lax.rsqrt(var + eps)

    # Affine with the dims_in_use mask folded in (padded cols zeroed here too).
    o_ref[...] = (yn * gamma_ref[...] + beta_ref[...]).astype(o_ref.dtype)


def _round_up(x, m):
    return ((x + m - 1) // m) * m


def _vmem_limit_bytes():
    """Per-generation scoped-VMEM budget: ~3/4 of physical, capped at 100 MiB.
    -> v5e/v6e (128 MiB): 96 MiB; v7x (64 MiB per TC): 48 MiB."""
    cap = None
    try:
        cap = getattr(pltpu.get_tpu_info(), "vmem_capacity_bytes", None)
    except Exception:
        cap = None
    if not cap:
        cap = 64 * 1024 * 1024  # conservative: v7x per-TC VMEM
    return int(min(cap * 3 // 4, 100 * 1024 * 1024))


def _choose_tile_b(B, FE, E_pad, D_pad, x_itemsize, vmem_budget):
    """Batch tile: lane-padding-aware VMEM accounting, ~8 MiB raw input per
    step, multiple of 8 sublanes, and >=2 grid steps when B allows (v7x
    megacore)."""
    per_row = (2 * FE * x_itemsize     # x tile, double-buffered (input dtype)
               + FE * 4                # x*x temporary (f32)
               + 3 * E_pad * 4         # s, sq, ix
               + 2 * D_pad * 4         # y, yn temporaries
               + 2 * D_pad * 4)        # output tile, double-buffered
    fixed = (FE * E_pad + E_pad * D_pad + 2 * D_pad) * 4   # resident S, W', gamma, beta
    headroom = 4 * 1024 * 1024                             # Mosaic internal scratch
    cap_rows = max(8, (vmem_budget - fixed - headroom) // per_row)
    target_rows = max(8, (8 * 1024 * 1024) // (FE * x_itemsize))  # ~8 MiB input/step

    tile = int(min(cap_rows, target_rows, B))
    if tile < B:
        tile = max(8, (tile // 8) * 8)       # sublane-friendly
    else:
        tile = B

    # Force >=2 grid steps when B allows so both v7x TensorCores get work.
    if tile >= B and B > 8:
        tile = _round_up(-(-B // 2), 8)      # roundup(ceil(B/2), 8) < B for B > 8
    if tile > B:
        tile = B
    return tile


def fm3d_forward(sparse_t, weight, gamma, beta, dims_in_use, *, tile_b=None):
    """sparse_t: (B, F, E) f32 or bf16; weight: (E, D); gamma/beta: (D,)."""
    B, F, E = sparse_t.shape
    E_w, D = weight.shape
    assert E_w == E
    assert 0 <= dims_in_use <= D

    FE = F * E
    D_pad = _round_up(D, 128)
    E_pad = _round_up(E, 128)
    x_itemsize = jnp.dtype(sparse_t.dtype).itemsize

    vmem_limit = _vmem_limit_bytes()
    if tile_b is None:
        tile_b = _choose_tile_b(B, FE, E_pad, D_pad, x_itemsize, vmem_limit)
    assert tile_b == B or tile_b % 8 == 0
    grid_b = pl.cdiv(B, tile_b)

    # dims_in_use mask folded into the LayerNorm affine.
    mask = jnp.concatenate(
        [jnp.ones((dims_in_use,), jnp.float32),
         jnp.zeros((D - dims_in_use,), jnp.float32)], axis=-1)
    gamma_eff = (gamma.astype(jnp.float32) * mask).reshape(1, D)
    beta_eff = (beta.astype(jnp.float32) * mask).reshape(1, D)

    # Fold LayerNorm mean-centering into the projection weight, then zero-pad
    # (padded columns stay exactly zero downstream).
    w32 = weight.astype(jnp.float32)
    w_centered = w32 - jnp.mean(w32, axis=1, keepdims=True)
    w_p = jnp.pad(w_centered, ((0, E_pad - E), (0, D_pad - D)))
    gamma_p = jnp.pad(gamma_eff, ((0, 0), (0, D_pad - D)))
    beta_p = jnp.pad(beta_eff, ((0, 0), (0, D_pad - D)))

    # Segment-sum matrix for the field-axis reduction: S[f*E + e, e] = 1.
    s_mat = jnp.tile(jnp.eye(E, dtype=jnp.float32), (F, 1))        # (FE, E)
    s_mat = jnp.pad(s_mat, ((0, 0), (0, E_pad - E)))               # (FE, E_pad)

    # Lane-dense, contiguous reshape of the input (no dtype cast -> no extra
    # HBM pass; bf16 input halves the dominant read stream).
    x2 = sparse_t.reshape(B, FE)

    kernel = functools.partial(fm3d_kernel, inv_d=1.0 / D, eps=1e-5)

    cost = pl.CostEstimate(
        flops=2 * B * FE * E_pad * 2 + 2 * B * E_pad * D_pad + 8 * B * D_pad,
        transcendentals=B,
        bytes_accessed=B * FE * x_itemsize + B * D_pad * 4
        + (FE * E_pad + E_pad * D_pad + 2 * D_pad) * 4,
    )

    out = pl.pallas_call(
        kernel,
        out_shape=jax.ShapeDtypeStruct((B, D_pad), jnp.float32),
        grid=(grid_b,),
        in_specs=[
            pl.BlockSpec((tile_b, FE), lambda i: (i, 0)),
            pl.BlockSpec((FE, E_pad), lambda i: (0, 0)),
            pl.BlockSpec((E_pad, D_pad), lambda i: (0, 0)),
            pl.BlockSpec((1, D_pad), lambda i: (0, 0)),
            pl.BlockSpec((1, D_pad), lambda i: (0, 0)),
        ],
        out_specs=pl.BlockSpec((tile_b, D_pad), lambda i: (i, 0)),
        compiler_params=pltpu.CompilerParams(
            dimension_semantics=("parallel",),
            vmem_limit_bytes=vmem_limit),
        cost_estimate=cost,
    )(x2, s_mat, w_p, gamma_p, beta_p)

    return out[:, :D] if D_pad != D else out


def fm3d_reference(sparse_t, weight, gamma, beta, dims_in_use):
    D = weight.shape[1]
    x = sparse_t.astype(jnp.float32)
    s = jnp.sum(x, axis=1)
    sq = jnp.sum(x ** 2, axis=1)
    ix = s ** 2 - sq
    y = ix @ weight
    mean = jnp.mean(y, axis=-1, keepdims=True)
    var = jnp.mean((y - mean) ** 2, axis=-1, keepdims=True)
    yn = (y - mean) / jnp.sqrt(var + 1e-5)
    yn = yn * gamma + beta
    mask = jnp.concatenate(
        [jnp.ones((dims_in_use,)), jnp.zeros((D - dims_in_use,))], axis=-1)
    return yn * mask


if __name__ == "__main__":
    # Module config: use_layernorm=True, max_dims_or_dims=D, fixed=False.
    B, F, E, D = 8, 8, 32, 64
    dims_in_use = 40

    key = jax.random.PRNGKey(0)
    kx, kw = jax.random.split(key)
    sparse_t = jax.random.normal(kx, (B, F, E), dtype=jnp.float32)

    # Deterministic params (nn.Linear-style uniform; LayerNorm affine = 1/0).
    bound = 1.0 / (E ** 0.5)
    weight = jax.random.uniform(kw, (E, D), jnp.float32, -bound, bound)
    gamma = jnp.ones((D,), jnp.float32)
    beta = jnp.zeros((D,), jnp.float32)

    # f32 path (matches the PyTorch module).
    out = jax.block_until_ready(fm3d_forward(sparse_t, weight, gamma, beta, dims_in_use))
    ref = fm3d_reference(sparse_t, weight, gamma, beta, dims_in_use)
    assert out.shape == (B, D)
    assert jnp.allclose(out, ref, atol=1e-4, rtol=1e-4), "f32 mismatch vs reference"

    # bf16 input path (halved HBM read traffic); reference fed the same
    # bf16-quantized values.
    x_bf16 = sparse_t.astype(jnp.bfloat16)
    out_bf = jax.block_until_ready(fm3d_forward(x_bf16, weight, gamma, beta, dims_in_use))
    ref_bf = fm3d_reference(x_bf16, weight, gamma, beta, dims_in_use)
    assert jnp.allclose(out_bf, ref_bf, atol=1e-3, rtol=1e-3), "bf16 mismatch vs reference"

    print("KERNEL_OK")
</pallas_src>

<mosaic_0001>
module attributes {stable_mosaic.version = 11 : i64} {
  func.func @fm3d_kernel(%arg0: i32, %arg1: memref<8x256xf32, #tpu.memory_space<vmem>>, %arg2: memref<256x128xf32, #tpu.memory_space<vmem>>, %arg3: memref<128x128xf32, #tpu.memory_space<vmem>>, %arg4: memref<1x128xf32, #tpu.memory_space<vmem>>, %arg5: memref<1x128xf32, #tpu.memory_space<vmem>>, %arg6: memref<8x128xf32, #tpu.memory_space<vmem>>) attributes {dimension_semantics = [#tpu.dimension_semantics<parallel>], iteration_bounds = array<i64: 1>, scalar_prefetch = 0 : i64, scratch_operands = 0 : i64, tpu.core_type = #tpu.core_type<tc>, window_params = [{transform_indices = @transform_0, window_bounds = array<i64: 8, 256>}, {pipeline_mode = #tpu.pipeline_mode<synchronous>, transform_indices = @transform_1, window_bounds = array<i64: 256, 128>}, {pipeline_mode = #tpu.pipeline_mode<synchronous>, transform_indices = @transform_2, window_bounds = array<i64: 128, 128>}, {pipeline_mode = #tpu.pipeline_mode<synchronous>, transform_indices = @transform_3, window_bounds = array<i64: 1, 128>}, {pipeline_mode = #tpu.pipeline_mode<synchronous>, transform_indices = @transform_4, window_bounds = array<i64: 1, 128>}, {transform_indices = @transform_5, window_bounds = array<i64: 8, 128>}]} {
    %c0 = arith.constant 0 : index
    %c0_0 = arith.constant 0 : index
    %0 = vector.load %arg1[%c0, %c0_0] : memref<8x256xf32, #tpu.memory_space<vmem>>, vector<8x256xf32>
    %c0_1 = arith.constant 0 : index
    %c0_2 = arith.constant 0 : index
    %1 = vector.load %arg2[%c0_1, %c0_2] : memref<256x128xf32, #tpu.memory_space<vmem>>, vector<256x128xf32>
    %cst = arith.constant dense<0.000000e+00> : vector<8x128xf32>
    %2 = tpu.matmul %0, %1, %cst {dimension_numbers = #tpu.dot_dimension_numbers<[1], [0], [0], [1], [0, 0, 1, 1], [], []>} : vector<8x256xf32>, vector<256x128xf32>, vector<8x128xf32> -> vector<8x128xf32>
    %3 = arith.mulf %0, %0 : vector<8x256xf32>
    %c0_3 = arith.constant 0 : index
    %c0_4 = arith.constant 0 : index
    %4 = vector.load %arg2[%c0_3, %c0_4] : memref<256x128xf32, #tpu.memory_space<vmem>>, vector<256x128xf32>
    %cst_5 = arith.constant dense<0.000000e+00> : vector<8x128xf32>
    %5 = tpu.matmul %3, %4, %cst_5 {dimension_numbers = #tpu.dot_dimension_numbers<[1], [0], [0], [1], [0, 0, 1, 1], [], []>} : vector<8x256xf32>, vector<256x128xf32>, vector<8x128xf32> -> vector<8x128xf32>
    %6 = arith.mulf %2, %2 : vector<8x128xf32>
    %7 = arith.subf %6, %5 : vector<8x128xf32>
    %c0_6 = arith.constant 0 : index
    %c0_7 = arith.constant 0 : index
    %8 = vector.load %arg3[%c0_6, %c0_7] : memref<128x128xf32, #tpu.memory_space<vmem>>, vector<128x128xf32>
    %cst_8 = arith.constant dense<0.000000e+00> : vector<8x128xf32>
    %9 = tpu.matmul %7, %8, %cst_8 {dimension_numbers = #tpu.dot_dimension_numbers<[1], [0], [0], [1], [0, 0, 1, 1], [], []>} : vector<8x128xf32>, vector<128x128xf32>, vector<8x128xf32> -> vector<8x128xf32>
    %10 = arith.mulf %9, %9 : vector<8x128xf32>
    %cst_9 = arith.constant dense<0.000000e+00> : vector<8xf32>
    %11 = vector.multi_reduction <add>, %10, %cst_9 [1] : vector<8x128xf32> to vector<8xf32>
    %12 = vector.shape_cast %11 : vector<8xf32> to vector<8x1xf32>
    %cst_10 = arith.constant 1.562500e-02 : f32
    %13 = vector.broadcast %cst_10 : f32 to vector<8x1xf32>
    %14 = arith.mulf %12, %13 : vector<8x1xf32>
    %cst_11 = arith.constant 9.99999974E-6 : f32
    %15 = vector.broadcast %cst_11 : f32 to vector<8x1xf32>
    %16 = arith.addf %14, %15 : vector<8x1xf32>
    %17 = math.rsqrt %16 : vector<8x1xf32>
    %18 = vector.broadcast %17 : vector<8x1xf32> to vector<8x128xf32>
    %19 = arith.mulf %9, %18 : vector<8x128xf32>
    %c0_12 = arith.constant 0 : index
    %c0_13 = arith.constant 0 : index
    %20 = vector.load %arg4[%c0_12, %c0_13] : memref<1x128xf32, #tpu.memory_space<vmem>>, vector<1x128xf32>
    %21 = vector.broadcast %20 : vector<1x128xf32> to vector<8x128xf32>
    %22 = arith.mulf %19, %21 : vector<8x128xf32>
    %c0_14 = arith.constant 0 : index
    %c0_15 = arith.constant 0 : index
    %23 = vector.load %arg5[%c0_14, %c0_15] : memref<1x128xf32, #tpu.memory_space<vmem>>, vector<1x128xf32>
    %24 = vector.broadcast %23 : vector<1x128xf32> to vector<8x128xf32>
    %25 = arith.addf %22, %24 : vector<8x128xf32>
    %c0_16 = arith.constant 0 : index
    %c0_17 = arith.constant 0 : index
    %26 = vector.load %arg6[%c0_16, %c0_17] : memref<8x128xf32, #tpu.memory_space<vmem>>, vector<8x128xf32>
    tpu.vector_store %arg6[%c0_16, %c0_17], %25 {strides = array<i32>} : memref<8x128xf32, #tpu.memory_space<vmem>>, vector<8x128xf32>,
    return
  }
  func.func @transform_0(%arg0: i32) -> (i32, i32) {
    %c0_i32 = arith.constant 0 : i32
    %c0_i32_0 = arith.constant 0 : i32
    return %arg0, %c0_i32 : i32, i32
  }
  func.func @transform_1(%arg0: i32) -> (i32, i32) {
    %c0_i32 = arith.constant 0 : i32
    %c0_i32_0 = arith.constant 0 : i32
    %c0_i32_1 = arith.constant 0 : i32
    return %c0_i32, %c0_i32_0 : i32, i32
  }
  func.func @transform_2(%arg0: i32) -> (i32, i32) {
    %c0_i32 = arith.constant 0 : i32
    %c0_i32_0 = arith.constant 0 : i32
    %c0_i32_1 = arith.constant 0 : i32
    return %c0_i32, %c0_i32_0 : i32, i32
  }
  func.func @transform_3(%arg0: i32) -> (i32, i32) {
    %c0_i32 = arith.constant 0 : i32
    %c0_i32_0 = arith.constant 0 : i32
    %c0_i32_1 = arith.constant 0 : i32
    return %c0_i32, %c0_i32_0 : i32, i32
  }
  func.func @transform_4(%arg0: i32) -> (i32, i32) {
    %c0_i32 = arith.constant 0 : i32
    %c0_i32_0 = arith.constant 0 : i32
    %c0_i32_1 = arith.constant 0 : i32
    return %c0_i32, %c0_i32_0 : i32, i32
  }
  func.func @transform_5(%arg0: i32) -> (i32, i32) {
    %c0_i32 = arith.constant 0 : i32
    %c0_i32_0 = arith.constant 0 : i32
    return %arg0, %c0_i32 : i32, i32
  }
}

</mosaic_0001>

<llo_original>
// kernel: tpu_custom_call.1
$region0: #{tpu_custom_call.1}
  #allocation0 [shape = 'u32[]', space=smem, size = 0x4, offset = 0x4, fixed_abs, tag = 'smem constant byte address 0x4 - core index']
  #allocation1 [shape = 'u32[144,128]{1,0:T(1,128)}', space=vmem, size = 0x12000, scoped, tag = 'internal scratch']
  %s0 = inlined_call_operand.hbm [shape: f32[8,256], index: 0, kind: input, shape index: {}]
  %s1 = inlined_call_operand.hbm [shape: f32[256,128], index: 1, kind: input, shape index: {}]
  %s2 = inlined_call_operand.hbm [shape: f32[128,128], index: 2, kind: input, shape index: {}]
  %s3 = inlined_call_operand.vmem [shape: f32[1,128], index: 3, kind: input, shape index: {}]
  %s4 = inlined_call_operand.vmem [shape: f32[1,128], index: 4, kind: input, shape index: {}]
  %s5 = inlined_call_operand.hbm [shape: f32[8,128], index: 5, kind: output, shape index: {}]
  %s6 = sld [smem:[#allocation0]]
  $region42: #{tpu_custom_call.1} parent=0
    _
  %s8 = ssub.s32 1, %s6
  %s9 = scalar_select 0, %s8, %s6
  $region1: #{tpu_custom_call.1} parent=0
    #allocation2 [shape = 'u8[8192]{0}', space=vmem, size = 0x2000, scoped, tag = 'input window, operand 0, single buffered']
    #allocation3 [shape = 's32[1]{0}', space=sflag, size = 0x4, scoped, tag = 'scoped memory for tpu_custom_call.1']
    #allocation4 [shape = 's32[1]{0}', space=sflag, size = 0x4, scoped, tag = 'scoped memory for tpu_custom_call.1']
    #allocation5 [shape = 'u8[131072]{0}', space=vmem, size = 0x20000, scoped, tag = 'input window, operand 1, single buffered']
    #allocation6 [shape = 's32[1]{0}', space=sflag, size = 0x4, scoped, tag = 'scoped memory for tpu_custom_call.1']
    #allocation7 [shape = 'u8[65536]{0}', space=vmem, size = 0x10000, scoped, tag = 'input window, operand 2, single buffered']
    #allocation8 [shape = 'u8[4096]{0}', space=vmem, size = 0x1000, scoped, tag = 'output window, operand 0, single buffered']
    %10 = vsyncpa [#allocation3], 0
    %11 = vsyncpa [#allocation6], 0
    %12 = vsyncpa [#allocation4], 0
    // Predicated region
    $region2: #{tpu_custom_call.1} parent=1 // pred_check
      _
    $region3: #{tpu_custom_call.1} parent=1 // pred_check_branch
      %14 = sbr.rel (0) target = $region5
    $region4: #{tpu_custom_call.1} parent=1 // pred_region
      %s16 = ssub.s32 256, 256
      %17 = vsyncadd [#allocation3], %s16
      %s19 = sshll.u32 [#allocation2], 4
      %s20 = int_to_ptr.vmem [resolvable:$true] %s19
      %22 = dma.hbm_to_vmem [thread:$0]  %s0, 256, %s20, [#allocation3]
    $region5: #{tpu_custom_call.1} parent=1 // pred_fallthru
      _
    // Predicated region
    $region6: #{tpu_custom_call.1} parent=1 // pred_check
      _
    $region7: #{tpu_custom_call.1} parent=1 // pred_check_branch
      %24 = sbr.rel (0) target = $region9
    $region8: #{tpu_custom_call.1} parent=1 // pred_region
      %s26 = ssub.s32 4096, 4096
      %27 = vsyncadd [#allocation6], %s26
      %s28 = sshll.u32 [#allocation5], 4
      %s29 = int_to_ptr.vmem [resolvable:$true] %s28
      %34 = dma.hbm_to_vmem [thread:$0]  %s1, 4096, %s29, [#allocation6], 128, 128, 8
    $region9: #{tpu_custom_call.1} parent=1 // pred_fallthru
      _
    // Predicated region
    $region10: #{tpu_custom_call.1} parent=1 // pred_check
      _
    $region11: #{tpu_custom_call.1} parent=1 // pred_check_branch
      %36 = sbr.rel (0) target = $region13
    $region12: #{tpu_custom_call.1} parent=1 // pred_region
      %s38 = ssub.s32 2048, 2048
      %39 = vsyncadd [#allocation6], %s38
      %s40 = sshll.u32 [#allocation7], 4
      %s41 = int_to_ptr.vmem [resolvable:$true] %s40
      %46 = dma.hbm_to_vmem [thread:$0]  %s2, 2048, %s41, [#allocation6], 128, 128, 8
    $region13: #{tpu_custom_call.1} parent=1 // pred_fallthru
      _
    // Predicated region
    $region14: #{tpu_custom_call.1} parent=1 // pred_check
      _
    $region15: #{tpu_custom_call.1} parent=1 // pred_check_branch
      %48 = sbr.rel (0) target = $region17
    $region16: #{tpu_custom_call.1} parent=1 // pred_region
      _
    $region17: #{tpu_custom_call.1} parent=1 // pred_fallthru
      _
    // Predicated region
    $region18: #{tpu_custom_call.1} parent=1 // pred_check
      _
    $region19: #{tpu_custom_call.1} parent=1 // pred_check_branch
      %50 = sbr.rel (0) target = $region21
    $region20: #{tpu_custom_call.1} parent=1 // pred_region
      _
    $region21: #{tpu_custom_call.1} parent=1 // pred_fallthru
      _
    // Predicated region
    $region22: #{tpu_custom_call.1} parent=1 // pred_check
      _
    $region23: #{tpu_custom_call.1} parent=1 // pred_check_branch
      %52 = sbr.rel (0) target = $region25
    $region24: #{tpu_custom_call.1} parent=1 // pred_region
      %53 = dma.done [#allocation3], 256
    $region25: #{tpu_custom_call.1} parent=1 // pred_fallthru
      _
    // Predicated region
    $region26: #{tpu_custom_call.1} parent=1 // pred_check
      _
    $region27: #{tpu_custom_call.1} parent=1 // pred_check_branch
      %55 = sbr.rel (0) target = $region29
    $region28: #{tpu_custom_call.1} parent=1 // pred_region
      %56 = dma.done [#allocation6], 4096
    $region29: #{tpu_custom_call.1} parent=1 // pred_fallthru
      _
    // Predicated region
    $region30: #{tpu_custom_call.1} parent=1 // pred_check
      _
    $region31: #{tpu_custom_call.1} parent=1 // pred_check_branch
      %58 = sbr.rel (0) target = $region33
    $region32: #{tpu_custom_call.1} parent=1 // pred_region
      %59 = dma.done [#allocation6], 2048
    $region33: #{tpu_custom_call.1} parent=1 // pred_fallthru
      _
    %v60 = vld [vmem:[#allocation2] sm:$0xff]
    %v61 = vld [vmem:[#allocation2 + $0x8] sm:$0xff]
    %v62 = vld [vmem:[#allocation5] sm:$0xff]
    %v63 = vld [vmem:[#allocation5 + $0x8] sm:$0xff]
    %v64 = vld [vmem:[#allocation5 + $0x10] sm:$0xff]
    %v65 = vld [vmem:[#allocation5 + $0x18] sm:$0xff]
    %v66 = vld [vmem:[#allocation5 + $0x20] sm:$0xff]
    %v67 = vld [vmem:[#allocation5 + $0x28] sm:$0xff]
    %v68 = vld [vmem:[#allocation5 + $0x30] sm:$0xff]
    %v69 = vld [vmem:[#allocation5 + $0x38] sm:$0xff]
    %v70 = vld [vmem:[#allocation5 + $0x40] sm:$0xff]
    %v71 = vld [vmem:[#allocation5 + $0x48] sm:$0xff]
    %v72 = vld [vmem:[#allocation5 + $0x50] sm:$0xff]
    %v73 = vld [vmem:[#allocation5 + $0x58] sm:$0xff]
    %v74 = vld [vmem:[#allocation5 + $0x60] sm:$0xff]
    %v75 = vld [vmem:[#allocation5 + $0x68] sm:$0xff]
    %v76 = vld [vmem:[#allocation5 + $0x70] sm:$0xff]
    %v77 = vld [vmem:[#allocation5 + $0x78] sm:$0xff]
    %v78 = vld [vmem:[#allocation5 + $0x80] sm:$0xff]
    %v79 = vld [vmem:[#allocation5 + $0x88] sm:$0xff]
    %v80 = vld [vmem:[#allocation5 + $0x90] sm:$0xff]
    %v81 = vld [vmem:[#allocation5 + $0x98] sm:$0xff]
    %v82 = vld [vmem:[#allocation5 + $0xa0] sm:$0xff]
    %v83 = vld [vmem:[#allocation5 + $0xa8] sm:$0xff]
    %v84 = vld [vmem:[#allocation5 + $0xb0] sm:$0xff]
    %v85 = vld [vmem:[#allocation5 + $0xb8] sm:$0xff]
    %v86 = vld [vmem:[#allocation5 + $0xc0] sm:$0xff]
    %v87 = vld [vmem:[#allocation5 + $0xc8] sm:$0xff]
    %v88 = vld [vmem:[#allocation5 + $0xd0] sm:$0xff]
    %v89 = vld [vmem:[#allocation5 + $0xd8] sm:$0xff]
    %v90 = vld [vmem:[#allocation5 + $0xe0] sm:$0xff]
    %v91 = vld [vmem:[#allocation5 + $0xe8] sm:$0xff]
    %v92 = vld [vmem:[#allocation5 + $0xf0] sm:$0xff]
    %v93 = vld [vmem:[#allocation5 + $0xf8] sm:$0xff]
    %94 = vmatprep.subr.mxu0 0.0
    %95 = vmatpush1.msra.mxu0 %v62
    %96 = vmatprep.subr.mxu0 0.0
    %97 = vmatpush1.msra.mxu0 %v63
    %98 = vmatprep.subr.mxu0 0.0
    %99 = vmatpush1.msra.mxu0 %v64
    %100 = vmatprep.subr.mxu0 0.0
    %101 = vmatpush1.msra.mxu0 %v65
    %102 = vmatprep.subr.mxu0 0.0
    %103 = vmatpush1.msra.mxu0 %v66
    %104 = vmatprep.subr.mxu0 0.0
    %105 = vmatpush1.msra.mxu0 %v67
    %106 = vmatprep.subr.mxu0 0.0
    %107 = vmatpush1.msra.mxu0 %v68
    %108 = vmatprep.subr.mxu0 0.0
    %109 = vmatpush1.msra.mxu0 %v69
    %110 = vmatprep.subr.mxu0 0.0
    %111 = vmatpush1.msra.mxu0 %v70
    %112 = vmatprep.subr.mxu0 0.0
    %113 = vmatpush1.msra.mxu0 %v71
    %114 = vmatprep.subr.mxu0 0.0
    %115 = vmatpush1.msra.mxu0 %v72
    %116 = vmatprep.subr.mxu0 0.0
    %117 = vmatpush1.msra.mxu0 %v73
    %118 = vmatprep.subr.mxu0 0.0
    %119 = vmatpush1.msra.mxu0 %v74
    %120 = vmatprep.subr.mxu0 0.0
    %121 = vmatpush1.msra.mxu0 %v75
    %122 = vmatprep.subr.mxu0 0.0
    %123 = vmatpush1.msra.mxu0 %v76
    %124 = vmatprep.subr.mxu0 0.0
    %125 = vmatpush1.msra.mxu0 %v77
    %126 = vmatprep.subr.mxu0 0.0
    %127 = vmatpush1.msra.mxu0 %v78
    %128 = vmatprep.subr.mxu0 0.0
    %129 = vmatpush1.msra.mxu0 %v79
    %130 = vmatprep.subr.mxu0 0.0
    %131 = vmatpush1.msra.mxu0 %v80
    %132 = vmatprep.subr.mxu0 0.0
    %133 = vmatpush1.msra.mxu0 %v81
    %134 = vmatprep.subr.mxu0 0.0
    %135 = vmatpush1.msra.mxu0 %v82
    %136 = vmatprep.subr.mxu0 0.0
    %137 = vmatpush1.msra.mxu0 %v83
    %138 = vmatprep.subr.mxu0 0.0
    %139 = vmatpush1.msra.mxu0 %v84
    %140 = vmatprep.subr.mxu0 0.0
    %141 = vmatpush1.msra.mxu0 %v85
    %142 = vmatprep.subr.mxu0 0.0
    %143 = vmatpush1.msra.mxu0 %v86
    %144 = vmatprep.subr.mxu0 0.0
    %145 = vmatpush1.msra.mxu0 %v87
    %146 = vmatprep.subr.mxu0 0.0
    %147 = vmatpush1.msra.mxu0 %v88
    %148 = vmatprep.subr.mxu0 0.0
    %149 = vmatpush1.msra.mxu0 %v89
    %150 = vmatprep.subr.mxu0 0.0
    %151 = vmatpush1.msra.mxu0 %v90
    %152 = vmatprep.subr.mxu0 0.0
    %153 = vmatpush1.msra.mxu0 %v91
    %154 = vmatprep.subr.mxu0 0.0
    %155 = vmatpush1.msra.mxu0 %v92
    %156 = vmatprep.subr.mxu0 0.0
    %157 = vmatpush1.msra.mxu0 %v93
    %158 = vmatprep.mubr.f32.mxu0 %v61
    %159 = vmatmul.mubr.f32.gmra.mrb[0].mxu0 %v60
    %v160 = vpop.f32.mrb[0].mxu0
    %v161 = vadd.f32 0.0, %v160
    %v162 = vpop.f32.mrb[0].mxu0
    %163 = vdwg.mxu0
    %v164 = vmul.f32 %v60, %v60
    %v165 = vmul.f32 %v61, %v61
    %166 = vmatprep.subr.mxu0 0.0
    %167 = vmatpush1.msra.mxu0 %v62
    %168 = vmatprep.subr.mxu0 0.0
    %169 = vmatpush1.msra.mxu0 %v63
    %170 = vmatprep.subr.mxu0 0.0
    %171 = vmatpush1.msra.mxu0 %v64
    %172 = vmatprep.subr.mxu0 0.0
    %173 = vmatpush1.msra.mxu0 %v65
    %174 = vmatprep.subr.mxu0 0.0
    %175 = vmatpush1.msra.mxu0 %v66
    %176 = vmatprep.subr.mxu0 0.0
    %177 = vmatpush1.msra.mxu0 %v67
    %178 = vmatprep.subr.mxu0 0.0
    %179 = vmatpush1.msra.mxu0 %v68
    %180 = vmatprep.subr.mxu0 0.0
    %181 = vmatpush1.msra.mxu0 %v69
    %182 = vmatprep.subr.mxu0 0.0
    %183 = vmatpush1.msra.mxu0 %v70
    %184 = vmatprep.subr.mxu0 0.0
    %185 = vmatpush1.msra.mxu0 %v71
    %186 = vmatprep.subr.mxu0 0.0
    %187 = vmatpush1.msra.mxu0 %v72
    %188 = vmatprep.subr.mxu0 0.0
    %189 = vmatpush1.msra.mxu0 %v73
    %190 = vmatprep.subr.mxu0 0.0
    %191 = vmatpush1.msra.mxu0 %v74
    %192 = vmatprep.subr.mxu0 0.0
    %193 = vmatpush1.msra.mxu0 %v75
    %194 = vmatprep.subr.mxu0 0.0
    %195 = vmatpush1.msra.mxu0 %v76
    %196 = vmatprep.subr.mxu0 0.0
    %197 = vmatpush1.msra.mxu0 %v77
    %198 = vmatprep.subr.mxu0 0.0
    %199 = vmatpush1.msra.mxu0 %v78
    %200 = vmatprep.subr.mxu0 0.0
    %201 = vmatpush1.msra.mxu0 %v79
    %202 = vmatprep.subr.mxu0 0.0
    %203 = vmatpush1.msra.mxu0 %v80
    %204 = vmatprep.subr.mxu0 0.0
    %205 = vmatpush1.msra.mxu0 %v81
    %206 = vmatprep.subr.mxu0 0.0
    %207 = vmatpush1.msra.mxu0 %v82
    %208 = vmatprep.subr.mxu0 0.0
    %209 = vmatpush1.msra.mxu0 %v83
    %210 = vmatprep.subr.mxu0 0.0
    %211 = vmatpush1.msra.mxu0 %v84
    %212 = vmatprep.subr.mxu0 0.0
    %213 = vmatpush1.msra.mxu0 %v85
    %214 = vmatprep.subr.mxu0 0.0
    %215 = vmatpush1.msra.mxu0 %v86
    %216 = vmatprep.subr.mxu0 0.0
    %217 = vmatpush1.msra.mxu0 %v87
    %218 = vmatprep.subr.mxu0 0.0
    %219 = vmatpush1.msra.mxu0 %v88
    %220 = vmatprep.subr.mxu0 0.0
    %221 = vmatpush1.msra.mxu0 %v89
    %222 = vmatprep.subr.mxu0 0.0
    %223 = vmatpush1.msra.mxu0 %v90
    %224 = vmatprep.subr.mxu0 0.0
    %225 = vmatpush1.msra.mxu0 %v91
    %226 = vmatprep.subr.mxu0 0.0
    %227 = vmatpush1.msra.mxu0 %v92
    %228 = vmatprep.subr.mxu0 0.0
    %229 = vmatpush1.msra.mxu0 %v93
    %230 = vmatprep.mubr.f32.mxu0 %v165
    %231 = vmatmul.mubr.f32.gmra.mrb[0].mxu0 %v164
    %v232 = vpop.f32.mrb[0].mxu0
    %v233 = vadd.f32 0.0, %v232
    %v234 = vpop.f32.mrb[0].mxu0
    %235 = vdwg.mxu0
    %v236 = vmul.f32 %v161, %v161
    %v237 = vsub.f32 %v236, %v233
    %v238 = vld [vmem:[#allocation7] sm:$0xff]
    %v239 = vld [vmem:[#allocation7 + $0x8] sm:$0xff]
    %v240 = vld [vmem:[#allocation7 + $0x10] sm:$0xff]
    %v241 = vld [vmem:[#allocation7 + $0x18] sm:$0xff]
    %v242 = vld [vmem:[#allocation7 + $0x20] sm:$0xff]
    %v243 = vld [vmem:[#allocation7 + $0x28] sm:$0xff]
    %v244 = vld [vmem:[#allocation7 + $0x30] sm:$0xff]
    %v245 = vld [vmem:[#allocation7 + $0x38] sm:$0xff]
    %v246 = vld [vmem:[#allocation7 + $0x40] sm:$0xff]
    %v247 = vld [vmem:[#allocation7 + $0x48] sm:$0xff]
    %v248 = vld [vmem:[#allocation7 + $0x50] sm:$0xff]
    %v249 = vld [vmem:[#allocation7 + $0x58] sm:$0xff]
    %v250 = vld [vmem:[#allocation7 + $0x60] sm:$0xff]
    %v251 = vld [vmem:[#allocation7 + $0x68] sm:$0xff]
    %v252 = vld [vmem:[#allocation7 + $0x70] sm:$0xff]
    %v253 = vld [vmem:[#allocation7 + $0x78] sm:$0xff]
    %254 = vmatprep.subr.mxu0 0.0
    %255 = vmatpush1.msra.mxu0 %v238
    %256 = vmatprep.subr.mxu0 0.0
    %257 = vmatpush1.msra.mxu0 %v239
    %258 = vmatprep.subr.mxu0 0.0
    %259 = vmatpush1.msra.mxu0 %v240
    %260 = vmatprep.subr.mxu0 0.0
    %261 = vmatpush1.msra.mxu0 %v241
    %262 = vmatprep.subr.mxu0 0.0
    %263 = vmatpush1.msra.mxu0 %v242
    %264 = vmatprep.subr.mxu0 0.0
    %265 = vmatpush1.msra.mxu0 %v243
    %266 = vmatprep.subr.mxu0 0.0
    %267 = vmatpush1.msra.mxu0 %v244
    %268 = vmatprep.subr.mxu0 0.0
    %269 = vmatpush1.msra.mxu0 %v245
    %270 = vmatprep.subr.mxu0 0.0
    %271 = vmatpush1.msra.mxu0 %v246
    %272 = vmatprep.subr.mxu0 0.0
    %273 = vmatpush1.msra.mxu0 %v247
    %274 = vmatprep.subr.mxu0 0.0
    %275 = vmatpush1.msra.mxu0 %v248
    %276 = vmatprep.subr.mxu0 0.0
    %277 = vmatpush1.msra.mxu0 %v249
    %278 = vmatprep.subr.mxu0 0.0
    %279 = vmatpush1.msra.mxu0 %v250
    %280 = vmatprep.subr.mxu0 0.0
    %281 = vmatpush1.msra.mxu0 %v251
    %282 = vmatprep.subr.mxu0 0.0
    %283 = vmatpush1.msra.mxu0 %v252
    %284 = vmatprep.subr.mxu0 0.0
    %285 = vmatpush1.msra.mxu0 %v253
    %286 = vmatprep.subr.mxu0 0.0
    %287 = vmatpush1.msra.mxu0 0.0
    %288 = vmatprep.subr.mxu0 0.0
    %289 = vmatpush1.msra.mxu0 0.0
    %290 = vmatprep.subr.mxu0 0.0
    %291 = vmatpush1.msra.mxu0 0.0
    %292 = vmatprep.subr.mxu0 0.0
    %293 = vmatpush1.msra.mxu0 0.0
    %294 = vmatprep.subr.mxu0 0.0
    %295 = vmatpush1.msra.mxu0 0.0
    %296 = vmatprep.subr.mxu0 0.0
    %297 = vmatpush1.msra.mxu0 0.0
    %298 = vmatprep.subr.mxu0 0.0
    %299 = vmatpush1.msra.mxu0 0.0
    %300 = vmatprep.subr.mxu0 0.0
    %301 = vmatpush1.msra.mxu0 0.0
    %302 = vmatprep.subr.mxu0 0.0
    %303 = vmatpush1.msra.mxu0 0.0
    %304 = vmatprep.subr.mxu0 0.0
    %305 = vmatpush1.msra.mxu0 0.0
    %306 = vmatprep.subr.mxu0 0.0
    %307 = vmatpush1.msra.mxu0 0.0
    %308 = vmatprep.subr.mxu0 0.0
    %309 = vmatpush1.msra.mxu0 0.0
    %310 = vmatprep.subr.mxu0 0.0
    %311 = vmatpush1.msra.mxu0 0.0
    %312 = vmatprep.subr.mxu0 0.0
    %313 = vmatpush1.msra.mxu0 0.0
    %314 = vmatprep.subr.mxu0 0.0
    %315 = vmatpush1.msra.mxu0 0.0
    %316 = vmatprep.subr.mxu0 0.0
    %317 = vmatpush1.msra.mxu0 0.0
    %318 = vmatprep.mubr.f32.mxu0 0.0
    %319 = vmatmul.mubr.f32.gmra.mrb[0].mxu0 %v237
    %v320 = vpop.f32.mrb[0].mxu0
    %v321 = vadd.f32 0.0, %v320
    %v322 = vpop.f32.mrb[0].mxu0
    %323 = vdwg.mxu0
    %v324 = vmul.f32 %v321, %v321
    %325 = vadd.xlane.f32.xlu0 %v324
    %v326 = vpop.xlane.xlu0 %325
    %v327 = vmul.f32 %v326, 0.015625
    %v328 = vadd.f32 %v327, 1e-05
    %v329 = vrsqrt.pop %v328
    %v330 = vmul.f32 %v321, %v329
    %v331 = vld [vmem:[%s3] sm:$0x1]
    %v333 = vlaneseq
    %v334 = vshrl.u32 %v333, 7
    %v335 = vsub.s32 0, %v334
    %v336 = vrot.slane %v331, %v335
    %v338 = vmul.f32 %v330, %v336
    %v339 = vld [vmem:[%s4] sm:$0x1]
    %v341 = vlaneseq
    %v342 = vshrl.u32 %v341, 7
    %v343 = vsub.s32 0, %v342
    %v344 = vrot.slane %v339, %v343
    %v346 = vadd.f32 %v338, %v344
    %347 = vst [vmem:[#allocation8] sm:$0xff] %v346
    // Predicated region
    $region34: #{tpu_custom_call.1} parent=1 // pred_check
      _
    $region35: #{tpu_custom_call.1} parent=1 // pred_check_branch
      %349 = sbr.rel (0) target = $region37
    $region36: #{tpu_custom_call.1} parent=1 // pred_region
      %s351 = ssub.s32 128, 128
      %352 = vsyncadd [#allocation4], %s351
      %s354 = sshll.u32 [#allocation8], 4
      %s355 = int_to_ptr.vmem [resolvable:$true] %s354
      %357 = dma.vmem_to_hbm [thread:$0]  %s355, 128, %s5, [#allocation4]
    $region37: #{tpu_custom_call.1} parent=1 // pred_fallthru
      _
    // Predicated region
    $region38: #{tpu_custom_call.1} parent=1 // pred_check
      _
    $region39: #{tpu_custom_call.1} parent=1 // pred_check_branch
      %359 = sbr.rel (0) target = $region41
    $region40: #{tpu_custom_call.1} parent=1 // pred_region
      %360 = dma.done [#allocation4], 128
    $region41: #{tpu_custom_call.1} parent=1 // pred_fallthru
      _
    %361 = vsyncpa [#allocation3], 1
    %362 = vsyncpa [#allocation6], 1
    %363 = vsyncpa [#allocation4], 1

</llo_original>
